<compile_context>
chip_gen: v7x
topology: tpu7x:2x2x1
jax: 0.10.0
libtpu: 0.0.40
codegen_flags: <defaults>
</compile_context>

<pallas_src>
import functools

import jax
import jax.numpy as jnp
from jax.experimental import pallas as pl
from jax.experimental.pallas import tpu as pltpu


# ---------------- architecture config (matches build_model semantics) ----------------
INPUT_SIZE = 32          # kwargs['input_size']
LAYERS = (64, 64)        # params['layers'] -> exactly ONE fc (ReLU) layer
OUTPUT_SIZE = 16         # kwargs['output_size']
BATCH = 16

LANE = 128               # TPU lane width; hidden/output feature dims padded to this
MAX_TILE_B = 512         # batch tile cap (512x128 f32 tile = 256 KiB -> fits all gens)
MIN_SPLIT_B = 256        # split into >=2 tiles only once each tile is at least this big
                         # (lets v7x's 2 TensorCores shard the "parallel" batch axis)


def _round_up(x, m):
    return ((x + m - 1) // m) * m


def _pick_batch_tiling(batch):
    """Static (Python-int) batch padding / tile-size choice."""
    b_pad = _round_up(max(batch, 8), 8)
    if b_pad >= 2 * MIN_SPLIT_B:
        tile_b = min(MAX_TILE_B, _round_up(b_pad // 2, 8))
        b_pad = _round_up(b_pad, tile_b)
    else:
        tile_b = b_pad            # whole batch in one tile -> grid=(1,)
    return b_pad, tile_b


def make_mlp_kernel(num_rest):
    """One batch tile: input_layer -> (num_rest-1) ReLU fc layers -> output layer.

    x_ref  : (TILE_B, d_in)     native input width (no feature padding -> minimal DMA)
    w0_ref : (d_in, D)          input_layer weight, out-dim padded to 128 lanes
    b0_ref : (1, D)             input_layer bias (padded)
    w_ref  : (num_rest, D, D)   fc layers + output layer, padded weight slab
    b_ref  : (num_rest, 1, D)   corresponding biases
    o_ref  : (TILE_B, D)        lane-dense padded output (sliced inside the jit)
    """
    def mlp_kernel(x_ref, w0_ref, b0_ref, w_ref, b_ref, o_ref):
        # input_layer: Linear, NO activation (input_dropout is identity in eval)
        h = jnp.dot(x_ref[...], w0_ref[...],
                    preferred_element_type=jnp.float32) + b0_ref[...]
        # hidden fc layers: Linear + ReLU (dropout identity in eval)
        for l in range(num_rest - 1):
            h = jnp.maximum(
                jnp.dot(h, w_ref[l], preferred_element_type=jnp.float32) + b_ref[l],
                0.0)
        # output_layer: Linear, NO activation
        h = jnp.dot(h, w_ref[num_rest - 1],
                    preferred_element_type=jnp.float32) + b_ref[num_rest - 1]
        o_ref[...] = h.astype(o_ref.dtype)
    return mlp_kernel


@functools.partial(jax.jit, static_argnames=("d_out",))
def mlp_forward(x, w0, b0, w_stack, b_stack, d_out):
    """End-to-end jitted forward: pad batch -> fused Pallas MLP -> slice output."""
    batch, d_in = x.shape
    num_rest = w_stack.shape[0]
    D = w_stack.shape[-1]

    b_pad, tile_b = _pick_batch_tiling(batch)
    x_pad = x if b_pad == batch else (
        jnp.zeros((b_pad, d_in), x.dtype).at[:batch].set(x))

    flops = 2 * b_pad * (d_in * D + num_rest * D * D)
    bytes_accessed = 4 * (x_pad.size + w0.size + b0.size
                          + w_stack.size + b_stack.size + b_pad * D)

    out_pad = pl.pallas_call(
        make_mlp_kernel(num_rest),
        out_shape=jax.ShapeDtypeStruct((b_pad, D), x.dtype),
        grid_spec=pltpu.PrefetchScalarGridSpec(
            num_scalar_prefetch=0,
            grid=(b_pad // tile_b,),
            in_specs=[
                pl.BlockSpec((tile_b, d_in), lambda i: (i, 0)),
                # Constant block index -> parameters stay resident in VMEM across tiles.
                pl.BlockSpec((d_in, D), lambda i: (0, 0)),
                pl.BlockSpec((1, D), lambda i: (0, 0)),
                pl.BlockSpec((num_rest, D, D), lambda i: (0, 0, 0)),
                pl.BlockSpec((num_rest, 1, D), lambda i: (0, 0, 0)),
            ],
            out_specs=pl.BlockSpec((tile_b, D), lambda i: (i, 0)),
        ),
        compiler_params=pltpu.CompilerParams(
            dimension_semantics=("parallel",)),
        cost_estimate=pl.CostEstimate(
            flops=flops, transcendentals=0, bytes_accessed=bytes_accessed),
    )(x_pad, w0, b0, w_stack, b_stack)

    # Slices fused into the same jit -> a forward is a single device dispatch.
    return out_pad[:batch, :d_out]


def pack_params(weights, biases):
    """Pad & stack parameters ONCE at model init (not per forward call).

    weights[l]: (din_l, dout_l) pre-transposed vs torch nn.Linear; biases[l]: (dout_l,).
    Returns the input_layer weight separately (native in-dim) plus a uniform slab for
    the remaining layers (fc layers + output layer).
    """
    d_in = int(weights[0].shape[0])
    d_out = int(weights[-1].shape[1])
    D = _round_up(max(int(w.shape[1]) for w in weights), LANE)   # 128 for this config
    num_rest = len(weights) - 1

    w0 = jnp.zeros((d_in, D), jnp.float32).at[:, :weights[0].shape[1]].set(weights[0])
    b0 = jnp.zeros((1, D), jnp.float32).at[0, :biases[0].shape[0]].set(biases[0])

    w_stack = jnp.zeros((num_rest, D, D), jnp.float32)
    b_stack = jnp.zeros((num_rest, 1, D), jnp.float32)
    for l, (w, b) in enumerate(zip(weights[1:], biases[1:])):
        w_stack = w_stack.at[l, :w.shape[0], :w.shape[1]].set(w)
        b_stack = b_stack.at[l, 0, :b.shape[0]].set(b)

    return {"w0": w0, "b0": b0, "w_stack": w_stack, "b_stack": b_stack, "d_out": d_out}


def init_params(key):
    """Deterministic synthetic parameters, PyTorch nn.Linear default init,
    stored pre-transposed as (in_features, out_features)."""
    layer_dims = ([(INPUT_SIZE, LAYERS[0])]
                  + list(zip(LAYERS[:-1], LAYERS[1:]))      # fc_layers
                  + [(LAYERS[-1], OUTPUT_SIZE)])
    weights, biases = [], []
    for din, dout in layer_dims:
        key, kw, kb = jax.random.split(key, 3)
        bound = 1.0 / float(jnp.sqrt(jnp.float32(din)))
        weights.append(jax.random.uniform(kw, (din, dout), jnp.float32, -bound, bound))
        biases.append(jax.random.uniform(kb, (dout,), jnp.float32, -bound, bound))
    return weights, biases


def mlp_reference(x, weights, biases):
    h = x @ weights[0] + biases[0]                    # input_layer, no activation
    for w, b in zip(weights[1:-1], biases[1:-1]):     # fc layers + relu
        h = jnp.maximum(h @ w + b, 0.0)
    return h @ weights[-1] + biases[-1]               # output_layer, no activation


if __name__ == "__main__":
    key = jax.random.PRNGKey(0)
    key, kx = jax.random.split(key)
    x = jax.random.normal(kx, (BATCH, INPUT_SIZE), jnp.float32)
    weights, biases = init_params(key)

    packed = pack_params(weights, biases)             # once, at "model init"

    out = mlp_forward(x, packed["w0"], packed["b0"],
                      packed["w_stack"], packed["b_stack"], packed["d_out"])
    out = jax.block_until_ready(out)

    ref = mlp_reference(x, weights, biases)
    assert out.shape == (BATCH, OUTPUT_SIZE)
    assert jnp.allclose(out, ref, atol=1e-4, rtol=1e-4), float(jnp.max(jnp.abs(out - ref)))

    print("KERNEL_OK")
</pallas_src>

<mosaic_0001>
module attributes {stable_mosaic.version = 11 : i64} {
  func.func @mlp_kernel(%arg0: i32, %arg1: memref<16x32xf32, #tpu.memory_space<vmem>>, %arg2: memref<32x128xf32, #tpu.memory_space<vmem>>, %arg3: memref<1x128xf32, #tpu.memory_space<vmem>>, %arg4: memref<2x128x128xf32, #tpu.memory_space<vmem>>, %arg5: memref<2x1x128xf32, #tpu.memory_space<vmem>>, %arg6: memref<16x128xf32, #tpu.memory_space<vmem>>) attributes {dimension_semantics = [#tpu.dimension_semantics<parallel>], iteration_bounds = array<i64: 1>, scalar_prefetch = 0 : i64, scratch_operands = 0 : i64, tpu.core_type = #tpu.core_type<tc>, window_params = [{transform_indices = @transform_0, window_bounds = array<i64: 16, 32>}, {pipeline_mode = #tpu.pipeline_mode<synchronous>, transform_indices = @transform_1, window_bounds = array<i64: 32, 128>}, {pipeline_mode = #tpu.pipeline_mode<synchronous>, transform_indices = @transform_2, window_bounds = array<i64: 1, 128>}, {pipeline_mode = #tpu.pipeline_mode<synchronous>, transform_indices = @transform_3, window_bounds = array<i64: 2, 128, 128>}, {pipeline_mode = #tpu.pipeline_mode<synchronous>, transform_indices = @transform_4, window_bounds = array<i64: 2, 1, 128>}, {transform_indices = @transform_5, window_bounds = array<i64: 16, 128>}]} {
    %c0 = arith.constant 0 : index
    %c0_0 = arith.constant 0 : index
    %0 = vector.load %arg1[%c0, %c0_0] : memref<16x32xf32, #tpu.memory_space<vmem>>, vector<16x32xf32>
    %c0_1 = arith.constant 0 : index
    %c0_2 = arith.constant 0 : index
    %1 = vector.load %arg2[%c0_1, %c0_2] : memref<32x128xf32, #tpu.memory_space<vmem>>, vector<32x128xf32>
    %cst = arith.constant dense<0.000000e+00> : vector<16x128xf32>
    %2 = tpu.matmul %0, %1, %cst {dimension_numbers = #tpu.dot_dimension_numbers<[1], [0], [0], [1], [0, 0, 1, 1], [], []>} : vector<16x32xf32>, vector<32x128xf32>, vector<16x128xf32> -> vector<16x128xf32>
    %c0_3 = arith.constant 0 : index
    %c0_4 = arith.constant 0 : index
    %3 = vector.load %arg3[%c0_3, %c0_4] : memref<1x128xf32, #tpu.memory_space<vmem>>, vector<1x128xf32>
    %4 = vector.broadcast %3 : vector<1x128xf32> to vector<16x128xf32>
    %5 = arith.addf %2, %4 : vector<16x128xf32>
    %c0_5 = arith.constant 0 : index
    %c0_6 = arith.constant 0 : index
    %c0_7 = arith.constant 0 : index
    %6 = vector.load %arg4[%c0_5, %c0_6, %c0_7] : memref<2x128x128xf32, #tpu.memory_space<vmem>>, vector<1x128x128xf32>
    %7 = vector.shape_cast %6 : vector<1x128x128xf32> to vector<128x128xf32>
    %cst_8 = arith.constant dense<0.000000e+00> : vector<16x128xf32>
    %8 = tpu.matmul %5, %7, %cst_8 {dimension_numbers = #tpu.dot_dimension_numbers<[1], [0], [0], [1], [0, 0, 1, 1], [], []>} : vector<16x128xf32>, vector<128x128xf32>, vector<16x128xf32> -> vector<16x128xf32>
    %c0_9 = arith.constant 0 : index
    %c0_10 = arith.constant 0 : index
    %c0_11 = arith.constant 0 : index
    %9 = vector.load %arg5[%c0_9, %c0_10, %c0_11] : memref<2x1x128xf32, #tpu.memory_space<vmem>>, vector<1x1x128xf32>
    %10 = vector.shape_cast %9 : vector<1x1x128xf32> to vector<1x128xf32>
    %11 = vector.broadcast %10 : vector<1x128xf32> to vector<16x128xf32>
    %12 = arith.addf %8, %11 : vector<16x128xf32>
    %cst_12 = arith.constant 0.000000e+00 : f32
    %13 = vector.broadcast %cst_12 : f32 to vector<16x128xf32>
    %14 = arith.maximumf %12, %13 : vector<16x128xf32>
    %c1 = arith.constant 1 : index
    %c0_13 = arith.constant 0 : index
    %c0_14 = arith.constant 0 : index
    %15 = vector.load %arg4[%c1, %c0_13, %c0_14] : memref<2x128x128xf32, #tpu.memory_space<vmem>>, vector<1x128x128xf32>
    %16 = vector.shape_cast %15 : vector<1x128x128xf32> to vector<128x128xf32>
    %cst_15 = arith.constant dense<0.000000e+00> : vector<16x128xf32>
    %17 = tpu.matmul %14, %16, %cst_15 {dimension_numbers = #tpu.dot_dimension_numbers<[1], [0], [0], [1], [0, 0, 1, 1], [], []>} : vector<16x128xf32>, vector<128x128xf32>, vector<16x128xf32> -> vector<16x128xf32>
    %c1_16 = arith.constant 1 : index
    %c0_17 = arith.constant 0 : index
    %c0_18 = arith.constant 0 : index
    %18 = vector.load %arg5[%c1_16, %c0_17, %c0_18] : memref<2x1x128xf32, #tpu.memory_space<vmem>>, vector<1x1x128xf32>
    %19 = vector.shape_cast %18 : vector<1x1x128xf32> to vector<1x128xf32>
    %20 = vector.broadcast %19 : vector<1x128xf32> to vector<16x128xf32>
    %21 = arith.addf %17, %20 : vector<16x128xf32>
    %c0_19 = arith.constant 0 : index
    %c0_20 = arith.constant 0 : index
    %22 = vector.load %arg6[%c0_19, %c0_20] : memref<16x128xf32, #tpu.memory_space<vmem>>, vector<16x128xf32>
    tpu.vector_store %arg6[%c0_19, %c0_20], %21 {strides = array<i32>} : memref<16x128xf32, #tpu.memory_space<vmem>>, vector<16x128xf32>,
    return
  }
  func.func @transform_0(%arg0: i32) -> (i32, i32) {
    %c0_i32 = arith.constant 0 : i32
    %c0_i32_0 = arith.constant 0 : i32
    return %arg0, %c0_i32 : i32, i32
  }
  func.func @transform_1(%arg0: i32) -> (i32, i32) {
    %c0_i32 = arith.constant 0 : i32
    %c0_i32_0 = arith.constant 0 : i32
    %c0_i32_1 = arith.constant 0 : i32
    return %c0_i32, %c0_i32_0 : i32, i32
  }
  func.func @transform_2(%arg0: i32) -> (i32, i32) {
    %c0_i32 = arith.constant 0 : i32
    %c0_i32_0 = arith.constant 0 : i32
    %c0_i32_1 = arith.constant 0 : i32
    return %c0_i32, %c0_i32_0 : i32, i32
  }
  func.func @transform_3(%arg0: i32) -> (i32, i32, i32) {
    %c0_i32 = arith.constant 0 : i32
    %c0_i32_0 = arith.constant 0 : i32
    %c0_i32_1 = arith.constant 0 : i32
    %c0_i32_2 = arith.constant 0 : i32
    return %c0_i32, %c0_i32_0, %c0_i32_1 : i32, i32, i32
  }
  func.func @transform_4(%arg0: i32) -> (i32, i32, i32) {
    %c0_i32 = arith.constant 0 : i32
    %c0_i32_0 = arith.constant 0 : i32
    %c0_i32_1 = arith.constant 0 : i32
    %c0_i32_2 = arith.constant 0 : i32
    return %c0_i32, %c0_i32_0, %c0_i32_1 : i32, i32, i32
  }
  func.func @transform_5(%arg0: i32) -> (i32, i32) {
    %c0_i32 = arith.constant 0 : i32
    %c0_i32_0 = arith.constant 0 : i32
    return %arg0, %c0_i32 : i32, i32
  }
}

</mosaic_0001>

<llo_original>
// kernel: mlp_forward.1
$region0: #{mlp_forward.1}
  #allocation0 [shape = 'u32[]', space=smem, size = 0x4, offset = 0x4, fixed_abs, tag = 'smem constant byte address 0x4 - core index']
  #allocation1 [shape = 'u32[144,128]{1,0:T(1,128)}', space=vmem, size = 0x12000, scoped, tag = 'internal scratch']
  %s0 = inlined_call_operand.hbm [shape: f32[16,32], index: 0, kind: input, shape index: {}]
  %s1 = inlined_call_operand.hbm [shape: f32[32,128], index: 1, kind: input, shape index: {}]
  %s2 = inlined_call_operand.vmem [shape: f32[1,128], index: 2, kind: input, shape index: {}]
  %s3 = inlined_call_operand.hbm [shape: f32[2,128,128], index: 3, kind: input, shape index: {}]
  %s4 = inlined_call_operand.vmem [shape: f32[2,1,128], index: 4, kind: input, shape index: {}]
  %s5 = inlined_call_operand.hbm [shape: f32[16,128], index: 5, kind: output, shape index: {}]
  %s6 = sld [smem:[#allocation0]]
  $region42: #{mlp_forward.1} parent=0
    _
  %s8 = ssub.s32 1, %s6
  %s9 = scalar_select 0, %s8, %s6
  $region1: #{mlp_forward.1} parent=0
    #allocation2 [shape = 'u8[8192]{0}', space=vmem, size = 0x2000, scoped, tag = 'input window, operand 0, single buffered']
    #allocation3 [shape = 's32[1]{0}', space=sflag, size = 0x4, scoped, tag = 'scoped memory for mlp_forward.1']
    #allocation4 [shape = 's32[1]{0}', space=sflag, size = 0x4, scoped, tag = 'scoped memory for mlp_forward.1']
    #allocation5 [shape = 'u8[16384]{0}', space=vmem, size = 0x4000, scoped, tag = 'input window, operand 1, single buffered']
    #allocation6 [shape = 's32[1]{0}', space=sflag, size = 0x4, scoped, tag = 'scoped memory for mlp_forward.1']
    #allocation7 [shape = 'u8[131072]{0}', space=vmem, size = 0x20000, scoped, tag = 'input window, operand 3, single buffered']
    #allocation8 [shape = 'u8[8192]{0}', space=vmem, size = 0x2000, scoped, tag = 'output window, operand 0, single buffered']
    %10 = vsyncpa [#allocation3], 0
    %11 = vsyncpa [#allocation6], 0
    %12 = vsyncpa [#allocation4], 0
    // Predicated region
    $region2: #{mlp_forward.1} parent=1 // pred_check
      _
    $region3: #{mlp_forward.1} parent=1 // pred_check_branch
      %14 = sbr.rel (0) target = $region5
    $region4: #{mlp_forward.1} parent=1 // pred_region
      %s16 = ssub.s32 256, 256
      %17 = vsyncadd [#allocation3], %s16
      %s18 = sshll.u32 [#allocation2], 4
      %s19 = int_to_ptr.vmem [resolvable:$true] %s18
      %24 = dma.hbm_to_vmem [thread:$0]  %s0, 256, %s19, [#allocation3], 128, 128, 8
    $region5: #{mlp_forward.1} parent=1 // pred_fallthru
      _
    // Predicated region
    $region6: #{mlp_forward.1} parent=1 // pred_check
      _
    $region7: #{mlp_forward.1} parent=1 // pred_check_branch
      %26 = sbr.rel (0) target = $region9
    $region8: #{mlp_forward.1} parent=1 // pred_region
      %s28 = ssub.s32 512, 512
      %29 = vsyncadd [#allocation6], %s28
      %s30 = sshll.u32 [#allocation5], 4
      %s31 = int_to_ptr.vmem [resolvable:$true] %s30
      %36 = dma.hbm_to_vmem [thread:$0]  %s1, 512, %s31, [#allocation6], 128, 128, 8
    $region9: #{mlp_forward.1} parent=1 // pred_fallthru
      _
    // Predicated region
    $region10: #{mlp_forward.1} parent=1 // pred_check
      _
    $region11: #{mlp_forward.1} parent=1 // pred_check_branch
      %38 = sbr.rel (0) target = $region13
    $region12: #{mlp_forward.1} parent=1 // pred_region
      _
    $region13: #{mlp_forward.1} parent=1 // pred_fallthru
      _
    // Predicated region
    $region14: #{mlp_forward.1} parent=1 // pred_check
      _
    $region15: #{mlp_forward.1} parent=1 // pred_check_branch
      %40 = sbr.rel (0) target = $region17
    $region16: #{mlp_forward.1} parent=1 // pred_region
      %s42 = ssub.s32 4096, 4096
      %43 = vsyncadd [#allocation6], %s42
      %s44 = sshll.u32 [#allocation7], 4
      %s45 = int_to_ptr.vmem [resolvable:$true] %s44
      %50 = dma.hbm_to_vmem [thread:$0]  %s3, 4096, %s45, [#allocation6], 128, 128, 8
    $region17: #{mlp_forward.1} parent=1 // pred_fallthru
      _
    // Predicated region
    $region18: #{mlp_forward.1} parent=1 // pred_check
      _
    $region19: #{mlp_forward.1} parent=1 // pred_check_branch
      %52 = sbr.rel (0) target = $region21
    $region20: #{mlp_forward.1} parent=1 // pred_region
      _
    $region21: #{mlp_forward.1} parent=1 // pred_fallthru
      _
    // Predicated region
    $region22: #{mlp_forward.1} parent=1 // pred_check
      _
    $region23: #{mlp_forward.1} parent=1 // pred_check_branch
      %54 = sbr.rel (0) target = $region25
    $region24: #{mlp_forward.1} parent=1 // pred_region
      %55 = dma.done [#allocation3], 256
    $region25: #{mlp_forward.1} parent=1 // pred_fallthru
      _
    // Predicated region
    $region26: #{mlp_forward.1} parent=1 // pred_check
      _
    $region27: #{mlp_forward.1} parent=1 // pred_check_branch
      %57 = sbr.rel (0) target = $region29
    $region28: #{mlp_forward.1} parent=1 // pred_region
      %58 = dma.done [#allocation6], 512
    $region29: #{mlp_forward.1} parent=1 // pred_fallthru
      _
    // Predicated region
    $region30: #{mlp_forward.1} parent=1 // pred_check
      _
    $region31: #{mlp_forward.1} parent=1 // pred_check_branch
      %60 = sbr.rel (0) target = $region33
    $region32: #{mlp_forward.1} parent=1 // pred_region
      %61 = dma.done [#allocation6], 4096
    $region33: #{mlp_forward.1} parent=1 // pred_fallthru
      _
    %v62 = vld [vmem:[#allocation2] sm:$0xff]
    %v63 = vld [vmem:[#allocation2 + $0x8] sm:$0xff]
    %v64 = vld [vmem:[#allocation5] sm:$0xff]
    %v65 = vld [vmem:[#allocation5 + $0x8] sm:$0xff]
    %v66 = vld [vmem:[#allocation5 + $0x10] sm:$0xff]
    %v67 = vld [vmem:[#allocation5 + $0x18] sm:$0xff]
    %v68 = vld [vmem:[%s2] sm:$0x1]
    %v70 = vlaneseq
    %v71 = vshrl.u32 %v70, 7
    %v72 = vsub.s32 0, %v71
    %v73 = vrot.slane %v68, %v72
    %vm75 = vcmask 261120
    %v77 = vsel %vm75, %v62, 0
    %v80 = vsel %vm75, %v63, 0
    %82 = vmatprep.subr.mxu0 0.0
    %83 = vmatpush1.msra.mxu0 %v64
    %84 = vmatprep.subr.mxu0 0.0
    %85 = vmatpush1.msra.mxu0 %v65
    %86 = vmatprep.subr.mxu0 0.0
    %87 = vmatpush1.msra.mxu0 %v66
    %88 = vmatprep.subr.mxu0 0.0
    %89 = vmatpush1.msra.mxu0 %v67
    %90 = vmatprep.subr.mxu0 0.0
    %91 = vmatpush1.msra.mxu0 0.0
    %92 = vmatprep.subr.mxu0 0.0
    %93 = vmatpush1.msra.mxu0 0.0
    %94 = vmatprep.subr.mxu0 0.0
    %95 = vmatpush1.msra.mxu0 0.0
    %96 = vmatprep.subr.mxu0 0.0
    %97 = vmatpush1.msra.mxu0 0.0
    %98 = vmatprep.subr.mxu0 0.0
    %99 = vmatpush1.msra.mxu0 0.0
    %100 = vmatprep.subr.mxu0 0.0
    %101 = vmatpush1.msra.mxu0 0.0
    %102 = vmatprep.subr.mxu0 0.0
    %103 = vmatpush1.msra.mxu0 0.0
    %104 = vmatprep.subr.mxu0 0.0
    %105 = vmatpush1.msra.mxu0 0.0
    %106 = vmatprep.subr.mxu0 0.0
    %107 = vmatpush1.msra.mxu0 0.0
    %108 = vmatprep.subr.mxu0 0.0
    %109 = vmatpush1.msra.mxu0 0.0
    %110 = vmatprep.subr.mxu0 0.0
    %111 = vmatpush1.msra.mxu0 0.0
    %112 = vmatprep.subr.mxu0 0.0
    %113 = vmatpush1.msra.mxu0 0.0
    %114 = vmatprep.subr.mxu0 0.0
    %115 = vmatpush1.msra.mxu0 0.0
    %116 = vmatprep.subr.mxu0 0.0
    %117 = vmatpush1.msra.mxu0 0.0
    %118 = vmatprep.subr.mxu0 0.0
    %119 = vmatpush1.msra.mxu0 0.0
    %120 = vmatprep.subr.mxu0 0.0
    %121 = vmatpush1.msra.mxu0 0.0
    %122 = vmatprep.subr.mxu0 0.0
    %123 = vmatpush1.msra.mxu0 0.0
    %124 = vmatprep.subr.mxu0 0.0
    %125 = vmatpush1.msra.mxu0 0.0
    %126 = vmatprep.subr.mxu0 0.0
    %127 = vmatpush1.msra.mxu0 0.0
    %128 = vmatprep.subr.mxu0 0.0
    %129 = vmatpush1.msra.mxu0 0.0
    %130 = vmatprep.subr.mxu0 0.0
    %131 = vmatpush1.msra.mxu0 0.0
    %132 = vmatprep.subr.mxu0 0.0
    %133 = vmatpush1.msra.mxu0 0.0
    %134 = vmatprep.subr.mxu0 0.0
    %135 = vmatpush1.msra.mxu0 0.0
    %136 = vmatprep.subr.mxu0 0.0
    %137 = vmatpush1.msra.mxu0 0.0
    %138 = vmatprep.subr.mxu0 0.0
    %139 = vmatpush1.msra.mxu0 0.0
    %140 = vmatprep.subr.mxu0 0.0
    %141 = vmatpush1.msra.mxu0 0.0
    %142 = vmatprep.subr.mxu0 0.0
    %143 = vmatpush1.msra.mxu0 0.0
    %144 = vmatprep.subr.mxu0 0.0
    %145 = vmatpush1.msra.mxu0 0.0
    %146 = vmatprep.mubr.f32.mxu0 0.0
    %147 = vmatmul.mubr.f32.gmra.mrb[0].mxu0 %v77
    %v148 = vpop.f32.mrb[0].mxu0
    %v149 = vadd.f32 %v73, %v148
    %v150 = vpop.f32.mrb[0].mxu0
    %151 = vmatprep.mubr.f32.mxu0 0.0
    %152 = vmatmul.mubr.f32.gmra.mrb[0].mxu0 %v80
    %v153 = vpop.f32.mrb[0].mxu0
    %v154 = vadd.f32 %v73, %v153
    %v155 = vpop.f32.mrb[0].mxu0
    %156 = vdwg.mxu0
    %v157 = vld [vmem:[#allocation7] sm:$0xff]
    %v158 = vld [vmem:[#allocation7 + $0x8] sm:$0xff]
    %v159 = vld [vmem:[#allocation7 + $0x10] sm:$0xff]
    %v160 = vld [vmem:[#allocation7 + $0x18] sm:$0xff]
    %v161 = vld [vmem:[#allocation7 + $0x20] sm:$0xff]
    %v162 = vld [vmem:[#allocation7 + $0x28] sm:$0xff]
    %v163 = vld [vmem:[#allocation7 + $0x30] sm:$0xff]
    %v164 = vld [vmem:[#allocation7 + $0x38] sm:$0xff]
    %v165 = vld [vmem:[#allocation7 + $0x40] sm:$0xff]
    %v166 = vld [vmem:[#allocation7 + $0x48] sm:$0xff]
    %v167 = vld [vmem:[#allocation7 + $0x50] sm:$0xff]
    %v168 = vld [vmem:[#allocation7 + $0x58] sm:$0xff]
    %v169 = vld [vmem:[#allocation7 + $0x60] sm:$0xff]
    %v170 = vld [vmem:[#allocation7 + $0x68] sm:$0xff]
    %v171 = vld [vmem:[#allocation7 + $0x70] sm:$0xff]
    %v172 = vld [vmem:[#allocation7 + $0x78] sm:$0xff]
    %v173 = vld [vmem:[%s4] sm:$0x1]
    %v175 = vlaneseq
    %v176 = vshrl.u32 %v175, 7
    %v177 = vsub.s32 0, %v176
    %v178 = vrot.slane %v173, %v177
    %180 = vmatprep.subr.mxu0 0.0
    %181 = vmatpush1.msra.mxu0 %v157
    %182 = vmatprep.subr.mxu0 0.0
    %183 = vmatpush1.msra.mxu0 %v158
    %184 = vmatprep.subr.mxu0 0.0
    %185 = vmatpush1.msra.mxu0 %v159
    %186 = vmatprep.subr.mxu0 0.0
    %187 = vmatpush1.msra.mxu0 %v160
    %188 = vmatprep.subr.mxu0 0.0
    %189 = vmatpush1.msra.mxu0 %v161
    %190 = vmatprep.subr.mxu0 0.0
    %191 = vmatpush1.msra.mxu0 %v162
    %192 = vmatprep.subr.mxu0 0.0
    %193 = vmatpush1.msra.mxu0 %v163
    %194 = vmatprep.subr.mxu0 0.0
    %195 = vmatpush1.msra.mxu0 %v164
    %196 = vmatprep.subr.mxu0 0.0
    %197 = vmatpush1.msra.mxu0 %v165
    %198 = vmatprep.subr.mxu0 0.0
    %199 = vmatpush1.msra.mxu0 %v166
    %200 = vmatprep.subr.mxu0 0.0
    %201 = vmatpush1.msra.mxu0 %v167
    %202 = vmatprep.subr.mxu0 0.0
    %203 = vmatpush1.msra.mxu0 %v168
    %204 = vmatprep.subr.mxu0 0.0
    %205 = vmatpush1.msra.mxu0 %v169
    %206 = vmatprep.subr.mxu0 0.0
    %207 = vmatpush1.msra.mxu0 %v170
    %208 = vmatprep.subr.mxu0 0.0
    %209 = vmatpush1.msra.mxu0 %v171
    %210 = vmatprep.subr.mxu0 0.0
    %211 = vmatpush1.msra.mxu0 %v172
    %212 = vmatprep.subr.mxu0 0.0
    %213 = vmatpush1.msra.mxu0 0.0
    %214 = vmatprep.subr.mxu0 0.0
    %215 = vmatpush1.msra.mxu0 0.0
    %216 = vmatprep.subr.mxu0 0.0
    %217 = vmatpush1.msra.mxu0 0.0
    %218 = vmatprep.subr.mxu0 0.0
    %219 = vmatpush1.msra.mxu0 0.0
    %220 = vmatprep.subr.mxu0 0.0
    %221 = vmatpush1.msra.mxu0 0.0
    %222 = vmatprep.subr.mxu0 0.0
    %223 = vmatpush1.msra.mxu0 0.0
    %224 = vmatprep.subr.mxu0 0.0
    %225 = vmatpush1.msra.mxu0 0.0
    %226 = vmatprep.subr.mxu0 0.0
    %227 = vmatpush1.msra.mxu0 0.0
    %228 = vmatprep.subr.mxu0 0.0
    %229 = vmatpush1.msra.mxu0 0.0
    %230 = vmatprep.subr.mxu0 0.0
    %231 = vmatpush1.msra.mxu0 0.0
    %232 = vmatprep.subr.mxu0 0.0
    %233 = vmatpush1.msra.mxu0 0.0
    %234 = vmatprep.subr.mxu0 0.0
    %235 = vmatpush1.msra.mxu0 0.0
    %236 = vmatprep.subr.mxu0 0.0
    %237 = vmatpush1.msra.mxu0 0.0
    %238 = vmatprep.subr.mxu0 0.0
    %239 = vmatpush1.msra.mxu0 0.0
    %240 = vmatprep.subr.mxu0 0.0
    %241 = vmatpush1.msra.mxu0 0.0
    %242 = vmatprep.subr.mxu0 0.0
    %243 = vmatpush1.msra.mxu0 0.0
    %244 = vmatprep.mubr.f32.mxu0 0.0
    %245 = vmatmul.mubr.f32.gmra.mrb[0].mxu0 %v149
    %v246 = vpop.f32.mrb[0].mxu0
    %v247 = vadd.f32 %v178, %v246
    %v248 = vpop.f32.mrb[0].mxu0
    %249 = vmatprep.mubr.f32.mxu0 0.0
    %250 = vmatmul.mubr.f32.gmra.mrb[0].mxu0 %v154
    %v251 = vpop.f32.mrb[0].mxu0
    %v252 = vadd.f32 %v178, %v251
    %v253 = vpop.f32.mrb[0].mxu0
    %254 = vdwg.mxu0
    %v255 = vmax.f32 %v247, 0.0
    %v256 = vmax.f32 %v252, 0.0
    %s257 = scalar_lea.vmem [#allocation7], 128
    %v258 = vld [vmem:[%s257] sm:$0xff]
    %v259 = vld [vmem:[%s257 + $0x8] sm:$0xff]
    %v260 = vld [vmem:[%s257 + $0x10] sm:$0xff]
    %v261 = vld [vmem:[%s257 + $0x18] sm:$0xff]
    %v262 = vld [vmem:[%s257 + $0x20] sm:$0xff]
    %v263 = vld [vmem:[%s257 + $0x28] sm:$0xff]
    %v264 = vld [vmem:[%s257 + $0x30] sm:$0xff]
    %v265 = vld [vmem:[%s257 + $0x38] sm:$0xff]
    %v266 = vld [vmem:[%s257 + $0x40] sm:$0xff]
    %v267 = vld [vmem:[%s257 + $0x48] sm:$0xff]
    %v268 = vld [vmem:[%s257 + $0x50] sm:$0xff]
    %v269 = vld [vmem:[%s257 + $0x58] sm:$0xff]
    %v270 = vld [vmem:[%s257 + $0x60] sm:$0xff]
    %v271 = vld [vmem:[%s257 + $0x68] sm:$0xff]
    %v272 = vld [vmem:[%s257 + $0x70] sm:$0xff]
    %v273 = vld [vmem:[%s257 + $0x78] sm:$0xff]
    %s274 = scalar_lea.vmem %s4, 1
    %v275 = vld [vmem:[%s274] sm:$0x1]
    %v277 = vlaneseq
    %v278 = vshrl.u32 %v277, 7
    %v279 = vsub.s32 0, %v278
    %v280 = vrot.slane %v275, %v279
    %282 = vmatprep.subr.mxu0 0.0
    %283 = vmatpush1.msra.mxu0 %v258
    %284 = vmatprep.subr.mxu0 0.0
    %285 = vmatpush1.msra.mxu0 %v259
    %286 = vmatprep.subr.mxu0 0.0
    %287 = vmatpush1.msra.mxu0 %v260
    %288 = vmatprep.subr.mxu0 0.0
    %289 = vmatpush1.msra.mxu0 %v261
    %290 = vmatprep.subr.mxu0 0.0
    %291 = vmatpush1.msra.mxu0 %v262
    %292 = vmatprep.subr.mxu0 0.0
    %293 = vmatpush1.msra.mxu0 %v263
    %294 = vmatprep.subr.mxu0 0.0
    %295 = vmatpush1.msra.mxu0 %v264
    %296 = vmatprep.subr.mxu0 0.0
    %297 = vmatpush1.msra.mxu0 %v265
    %298 = vmatprep.subr.mxu0 0.0
    %299 = vmatpush1.msra.mxu0 %v266
    %300 = vmatprep.subr.mxu0 0.0
    %301 = vmatpush1.msra.mxu0 %v267
    %302 = vmatprep.subr.mxu0 0.0
    %303 = vmatpush1.msra.mxu0 %v268
    %304 = vmatprep.subr.mxu0 0.0
    %305 = vmatpush1.msra.mxu0 %v269
    %306 = vmatprep.subr.mxu0 0.0
    %307 = vmatpush1.msra.mxu0 %v270
    %308 = vmatprep.subr.mxu0 0.0
    %309 = vmatpush1.msra.mxu0 %v271
    %310 = vmatprep.subr.mxu0 0.0
    %311 = vmatpush1.msra.mxu0 %v272
    %312 = vmatprep.subr.mxu0 0.0
    %313 = vmatpush1.msra.mxu0 %v273
    %314 = vmatprep.subr.mxu0 0.0
    %315 = vmatpush1.msra.mxu0 0.0
    %316 = vmatprep.subr.mxu0 0.0
    %317 = vmatpush1.msra.mxu0 0.0
    %318 = vmatprep.subr.mxu0 0.0
    %319 = vmatpush1.msra.mxu0 0.0
    %320 = vmatprep.subr.mxu0 0.0
    %321 = vmatpush1.msra.mxu0 0.0
    %322 = vmatprep.subr.mxu0 0.0
    %323 = vmatpush1.msra.mxu0 0.0
    %324 = vmatprep.subr.mxu0 0.0
    %325 = vmatpush1.msra.mxu0 0.0
    %326 = vmatprep.subr.mxu0 0.0
    %327 = vmatpush1.msra.mxu0 0.0
    %328 = vmatprep.subr.mxu0 0.0
    %329 = vmatpush1.msra.mxu0 0.0
    %330 = vmatprep.subr.mxu0 0.0
    %331 = vmatpush1.msra.mxu0 0.0
    %332 = vmatprep.subr.mxu0 0.0
    %333 = vmatpush1.msra.mxu0 0.0
    %334 = vmatprep.subr.mxu0 0.0
    %335 = vmatpush1.msra.mxu0 0.0
    %336 = vmatprep.subr.mxu0 0.0
    %337 = vmatpush1.msra.mxu0 0.0
    %338 = vmatprep.subr.mxu0 0.0
    %339 = vmatpush1.msra.mxu0 0.0
    %340 = vmatprep.subr.mxu0 0.0
    %341 = vmatpush1.msra.mxu0 0.0
    %342 = vmatprep.subr.mxu0 0.0
    %343 = vmatpush1.msra.mxu0 0.0
    %344 = vmatprep.subr.mxu0 0.0
    %345 = vmatpush1.msra.mxu0 0.0
    %346 = vmatprep.mubr.f32.mxu0 0.0
    %347 = vmatmul.mubr.f32.gmra.mrb[0].mxu0 %v255
    %v348 = vpop.f32.mrb[0].mxu0
    %v349 = vadd.f32 %v280, %v348
    %v350 = vpop.f32.mrb[0].mxu0
    %351 = vmatprep.mubr.f32.mxu0 0.0
    %352 = vmatmul.mubr.f32.gmra.mrb[0].mxu0 %v256
    %v353 = vpop.f32.mrb[0].mxu0
    %v354 = vadd.f32 %v280, %v353
    %v355 = vpop.f32.mrb[0].mxu0
    %356 = vdwg.mxu0
    %357 = vst [vmem:[#allocation8] sm:$0xff] %v349
    %358 = vst [vmem:[#allocation8 + $0x8] sm:$0xff] %v354
    // Predicated region
    $region34: #{mlp_forward.1} parent=1 // pred_check
      _
    $region35: #{mlp_forward.1} parent=1 // pred_check_branch
      %360 = sbr.rel (0) target = $region37
    $region36: #{mlp_forward.1} parent=1 // pred_region
      %s362 = ssub.s32 256, 256
      %363 = vsyncadd [#allocation4], %s362
      %s364 = sshll.u32 [#allocation8], 4
      %s365 = int_to_ptr.vmem [resolvable:$true] %s364
      %370 = dma.vmem_to_hbm [thread:$0]  %s365, 256, %s5, [#allocation4], 128, 128, 8
    $region37: #{mlp_forward.1} parent=1 // pred_fallthru
      _
    // Predicated region
    $region38: #{mlp_forward.1} parent=1 // pred_check
      _
    $region39: #{mlp_forward.1} parent=1 // pred_check_branch
      %372 = sbr.rel (0) target = $region41
    $region40: #{mlp_forward.1} parent=1 // pred_region
      %373 = dma.done [#allocation4], 256
    $region41: #{mlp_forward.1} parent=1 // pred_fallthru
      _
    %374 = vsyncpa [#allocation3], 1
    %375 = vsyncpa [#allocation6], 1
    %376 = vsyncpa [#allocation4], 1

</llo_original>
